<compile_context>
chip_gen: v6e
topology: v6e:2x2x1
jax: 0.10.0
libtpu: 0.0.40
codegen_flags: <defaults>
</compile_context>

<pallas_src>
import jax
import jax.numpy as jnp
from jax import lax
from jax.experimental import pallas as pl
from jax.experimental.pallas import tpu as pltpu

_NEG_BIG = -1e30


def _round_up(x, m):
    return ((x + m - 1) // m) * m


def _softmax_compute_dtype():
    """bf16 elementwise softmax only on chips with a bf16 VPU/EUP (v6e / v7x)."""
    try:
        kind = jax.devices()[0].device_kind.lower()
    except Exception:
        return jnp.float32
    if any(tag in kind for tag in ("v6", "v7", "tpu7")):
        return jnp.bfloat16
    return jnp.float32


# ---------------------------------------------------------------------------
# Projection kernel (runs once per layer, row-tiled over nodes).
# ---------------------------------------------------------------------------
def _projection_kernel(x_ref, w_ref, asrc_ref, adst_ref, h_ref, ssrc_ref, sdst_ref):
    h = jnp.dot(x_ref[...], w_ref[...], preferred_element_type=jnp.float32)   # (TP, H*F)
    sdst_ref[...] = jnp.dot(h, adst_ref[...], preferred_element_type=jnp.float32)  # (TP, H)
    # (H*F, H) x (TP, H*F) contracting H*F -> (H, TP): produced already transposed so
    # the aggregation kernel can slice a lane-contiguous (1, TK) source-score row.
    ssrc_ref[...] = lax.dot_general(asrc_ref[...], h, (((0,), (1,)), ((), ())),
                                    preferred_element_type=jnp.float32)        # (H, TP)
    h_ref[...] = h.astype(h_ref.dtype)                                         # bf16


def gat_project(x, w, a_src_mat, a_dst_mat, *, tp):
    n_pad, fin = x.shape
    hf = w.shape[1]
    num_heads = a_src_mat.shape[1]
    return pl.pallas_call(
        _projection_kernel,
        out_shape=(
            jax.ShapeDtypeStruct((n_pad, hf), jnp.bfloat16),       # h (aggregation operand)
            jax.ShapeDtypeStruct((num_heads, n_pad), jnp.float32), # s_src^T
            jax.ShapeDtypeStruct((n_pad, num_heads), jnp.float32), # s_dst
        ),
        grid_spec=pltpu.PrefetchScalarGridSpec(
            num_scalar_prefetch=0,
            grid=(n_pad // tp,),
            in_specs=[
                pl.BlockSpec((tp, fin), lambda r: (r, 0)),
                pl.BlockSpec((fin, hf), lambda r: (0, 0)),
                pl.BlockSpec((hf, num_heads), lambda r: (0, 0)),
                pl.BlockSpec((hf, num_heads), lambda r: (0, 0)),
            ],
            out_specs=[
                pl.BlockSpec((tp, hf), lambda r: (r, 0)),
                pl.BlockSpec((num_heads, tp), lambda r: (0, r)),
                pl.BlockSpec((tp, num_heads), lambda r: (r, 0)),
            ],
        ),
        compiler_params=pltpu.CompilerParams(
            dimension_semantics=("parallel",),
            vmem_limit_bytes=32 * 1024 * 1024,
        ),
    )(x, w, a_src_mat, a_dst_mat)


# ---------------------------------------------------------------------------
# Aggregation kernel: masked multi-head attention with flash-style online
# softmax over source-column tiles, fused bias + activation on the last step.
# ---------------------------------------------------------------------------
def _make_gat_agg_kernel(num_heads, fout, activation, n_valid_cols, compute_dtype):

    def kernel(sdst_ref, ssrc_ref, h_ref, bias_ref, adj_ref, o_ref,
               m_sc, l_sc, acc_sc):
        k = pl.program_id(1)

        @pl.when(k == 0)
        def _():
            m_sc[...] = jnp.full(m_sc.shape, -jnp.inf, jnp.float32)
            l_sc[...] = jnp.zeros(l_sc.shape, jnp.float32)
            acc_sc[...] = jnp.zeros(acc_sc.shape, jnp.float32)

        cdt = compute_dtype
        zero = jnp.asarray(0.0, cdt)
        neg = jnp.asarray(_NEG_BIG, cdt)
        # Additive neighbor mask: computed once per (row, col) tile, shared by all
        # heads; no int8->f32 convert, no per-head select.
        mask_bias = jnp.where(adj_ref[...] > 0, zero, neg)            # (TM, TK)

        s_dst = sdst_ref[...].astype(cdt)                              # (TM, H)
        s_src = ssrc_ref[...].astype(cdt)                              # (H, TK)

        # Static unroll over heads (H is small).
        for h in range(num_heads):
            c0, c1 = h * fout, (h + 1) * fout
            # e[i, j] = LeakyReLU(a_dst.h_i + a_src.h_j) + mask   (slope 0.2)
            e = s_dst[:, h:h + 1] + s_src[h:h + 1, :] + mask_bias     # (TM, TK)
            e = jnp.maximum(e, 0.2 * e)                                # LeakyReLU
            m_prev = m_sc[:, h:h + 1]                                  # (TM, 1) f32
            m_cur = jnp.max(e, axis=-1, keepdims=True).astype(jnp.float32)
            m_new = jnp.maximum(m_prev, m_cur)
            p = jnp.exp(e - m_new.astype(cdt))                         # (TM, TK)
            alpha = jnp.exp(m_prev - m_new)                            # (TM, 1) f32
            l_sc[:, h:h + 1] = alpha * l_sc[:, h:h + 1] + jnp.sum(
                p.astype(jnp.float32), axis=-1, keepdims=True)
            acc_sc[:, c0:c1] = alpha * acc_sc[:, c0:c1] + jnp.dot(
                p.astype(jnp.bfloat16), h_ref[:, c0:c1],
                preferred_element_type=jnp.float32)
            m_sc[:, h:h + 1] = m_new

        @pl.when(k == pl.num_programs(1) - 1)
        def _():
            # Normalize AFTER aggregation (Fout-wide multiply instead of N-wide).
            inv_l = pl.reciprocal(l_sc[...], approx=True)              # (TM, H)
            bias = bias_ref[...]                                       # (1, H*Fout)
            for h in range(num_heads):
                c0, c1 = h * fout, (h + 1) * fout
                out_h = acc_sc[:, c0:c1] * inv_l[:, h:h + 1] + bias[:, c0:c1]

                if activation == "elu":
                    out_h = jnp.where(out_h > 0, out_h, jnp.exp(out_h) - 1.0)
                elif activation == "log_softmax":
                    # Class dim is lane-padded; restrict to first n_valid_cols lanes.
                    col = lax.broadcasted_iota(jnp.int32, out_h.shape, 1)
                    valid = col < n_valid_cols
                    out_h = jnp.where(valid, out_h, _NEG_BIG)
                    mx = jnp.max(out_h, axis=-1, keepdims=True)
                    z = out_h - mx
                    lse = jnp.log(jnp.sum(jnp.exp(z), axis=-1, keepdims=True))
                    out_h = jnp.where(valid, z - lse, 0.0)

                o_ref[:, c0:c1] = out_h

    return kernel


def gat_layer(x, adj, w, a_src_mat, a_dst_mat, bias, *, activation,
              n_valid_cols, tm, tk, compute_dtype):
    """x: [N_pad, Fin] f32; adj: [N_pad, N_pad] int8 (adj[i, j]=1 iff edge j->i or
    self-loop); w: [Fin, H*Fout]; a_*_mat: [H*Fout, H] block-diag; bias: [1, H*Fout]."""
    n_pad, fin = x.shape
    hf = w.shape[1]
    num_heads = a_src_mat.shape[1]
    fout = hf // num_heads
    if activation == "log_softmax":
        # concat=False head-mean is only fused correctly when H == 1.
        assert num_heads == 1, "fused log_softmax requires a single head"
    assert n_pad % tm == 0 and n_pad % tk == 0

    # Projection row tile: full height for small graphs, 256 otherwise (keeps the
    # (H, tp) transposed-score output lane-dense / constraint-clean).
    tp = n_pad if n_pad <= 512 else 256
    assert n_pad % tp == 0
    h_bf, s_src_t, s_dst = gat_project(x, w, a_src_mat, a_dst_mat, tp=tp)

    kernel = _make_gat_agg_kernel(num_heads, fout, activation, n_valid_cols,
                                  compute_dtype)
    return pl.pallas_call(
        kernel,
        out_shape=jax.ShapeDtypeStruct((n_pad, hf), jnp.float32),
        grid_spec=pltpu.PrefetchScalarGridSpec(
            num_scalar_prefetch=0,
            grid=(n_pad // tm, n_pad // tk),
            in_specs=[
                pl.BlockSpec((tm, num_heads), lambda r, k: (r, 0)),  # s_dst row tile
                pl.BlockSpec((num_heads, tk), lambda r, k: (0, k)),  # s_src^T col tile
                pl.BlockSpec((tk, hf), lambda r, k: (k, 0)),         # h (bf16) col tile
                pl.BlockSpec((1, hf), lambda r, k: (0, 0)),          # bias
                pl.BlockSpec((tm, tk), lambda r, k: (r, k)),         # int8 adjacency tile
            ],
            out_specs=pl.BlockSpec((tm, hf), lambda r, k: (r, 0)),
            scratch_shapes=[
                pltpu.VMEM((tm, num_heads), jnp.float32),  # running max
                pltpu.VMEM((tm, num_heads), jnp.float32),  # running denom
                pltpu.VMEM((tm, hf), jnp.float32),         # running weighted sum
            ],
        ),
        compiler_params=pltpu.CompilerParams(
            dimension_semantics=("parallel", "arbitrary"),
            vmem_limit_bytes=32 * 1024 * 1024,             # safe on v5e/v6e/v7x
        ),
    )(s_dst, s_src_t, h_bf, bias, adj)


def attention_gnn_forward(params, x_pad, adj_pad, *, num_nodes, num_classes, tm, tk):
    cdt = _softmax_compute_dtype()
    # conv1: GATConv(F -> 8, heads=8, concat) + ELU (fused)
    x1 = gat_layer(x_pad, adj_pad, params["w1"], params["as1"], params["ad1"],
                   params["b1"], activation="elu", n_valid_cols=0,
                   tm=tm, tk=tk, compute_dtype=cdt)
    # conv2: GATConv(64 -> C, heads=1, concat=False) + log_softmax (fused)
    x2 = gat_layer(x1, adj_pad, params["w2"], params["as2"], params["ad2"],
                   params["b2"], activation="log_softmax", n_valid_cols=num_classes,
                   tm=tm, tk=tk, compute_dtype=cdt)
    return x2[:num_nodes, :num_classes]


def _block_diag_att(a):
    """[H, Fout] per-head attention vector -> [H*Fout, H] block-diagonal matrix."""
    num_heads, fout = a.shape
    idx = jnp.arange(num_heads * fout)
    mat = jnp.zeros((num_heads * fout, num_heads), jnp.float32)
    return mat.at[idx, idx // fout].set(a.reshape(-1))


def init_params(key, num_features, num_classes, c_pad, heads=8, hidden=8):
    ks = jax.random.split(key, 6)

    def glorot(k, shape, fan_in, fan_out):
        s = jnp.sqrt(6.0 / (fan_in + fan_out))
        return jax.random.uniform(k, shape, jnp.float32, -s, s)

    hf1 = heads * hidden
    # Layer 1: heads fused along the lane (output-feature) dim.
    w1 = glorot(ks[0], (num_features, hf1), num_features, hf1)
    as1 = _block_diag_att(glorot(ks[1], (heads, hidden), hidden, 1))
    ad1 = _block_diag_att(glorot(ks[2], (heads, hidden), hidden, 1))
    b1 = jnp.zeros((1, hf1), jnp.float32)

    # Layer 2: single head; class dim lane-padded to c_pad (zeros beyond num_classes).
    w2 = jnp.zeros((hf1, c_pad), jnp.float32).at[:, :num_classes].set(
        glorot(ks[3], (hf1, num_classes), hf1, num_classes))
    a2s = jnp.zeros((1, c_pad), jnp.float32).at[:, :num_classes].set(
        glorot(ks[4], (1, num_classes), num_classes, 1))
    a2d = jnp.zeros((1, c_pad), jnp.float32).at[:, :num_classes].set(
        glorot(ks[5], (1, num_classes), num_classes, 1))
    return dict(
        w1=w1, as1=as1, ad1=ad1, b1=b1,
        w2=w2, as2=_block_diag_att(a2s), ad2=_block_diag_att(a2d),
        b2=jnp.zeros((1, c_pad), jnp.float32),
    )


def build_adjacency(edge_index, num_nodes, n_pad):
    src, dst = edge_index[0], edge_index[1]
    adj = jnp.zeros((n_pad, n_pad), jnp.int8)
    adj = adj.at[dst, src].set(jnp.int8(1))            # message j (src) -> i (dst)
    diag = jnp.arange(num_nodes)
    adj = adj.at[diag, diag].set(jnp.int8(1))          # add_self_loops=True default
    return adj


def choose_tiling(num_nodes, tm_target=256, tk_target=512):
    """Row tile (targets), column tile (sources) and padded node count.

    Row tiles use a sublane quantum of 32 (int8 adjacency native tiling) unless a
    single full-height tile is used; prefers >=2 row tiles (megacore) with minimal
    padding.  Column tiles are either the full padded width (small graphs) or a
    128-multiple, bounding VMEM independently of N.
    """
    if num_nodes > 2 * tm_target:
        tm = tm_target
        n_pad = _round_up(num_nodes, tm)
        tk = tk_target if n_pad % tk_target == 0 else tm
    else:
        half = _round_up((num_nodes + 1) // 2, 32)
        if half < num_nodes:                 # >= 2 row tiles, little padding
            tm = half
        else:                                # tiny graph: one full-height tile
            tm = _round_up(max(num_nodes, 8), 8)
        n_pad = _round_up(num_nodes, tm)
        tk = n_pad                           # single source-column tile
    return tm, tk, n_pad


if __name__ == "__main__":
    key = jax.random.PRNGKey(0)
    N, F, C, E = 16, 8, 4, 48      # nodes, num_features, num_classes, num_edges
    HEADS, HIDDEN = 8, 8
    C_PAD = _round_up(C, 128)      # lane-dense layer-2 output store

    k_x, k_e1, k_e2, k_p = jax.random.split(key, 4)
    x = jax.random.normal(k_x, (N, F), jnp.float32)
    src = jax.random.randint(k_e1, (E,), 0, N)
    dst = jax.random.randint(k_e2, (E,), 0, N)
    edge_index = jnp.stack([src, dst])                 # [2, E], PyG convention

    tm, tk, n_pad = choose_tiling(N)
    x_pad = jnp.zeros((n_pad, F), jnp.float32).at[:N].set(x)
    adj = build_adjacency(edge_index, N, n_pad)
    params = init_params(k_p, F, C, C_PAD, heads=HEADS, hidden=HIDDEN)

    out = attention_gnn_forward(params, x_pad, adj,
                                num_nodes=N, num_classes=C, tm=tm, tk=tk)
    out = jax.block_until_ready(out)

    assert out.shape == (N, C), out.shape
    assert bool(jnp.all(jnp.isfinite(out)))
    # rows of log_softmax must exp-sum to 1
    assert bool(jnp.allclose(jnp.sum(jnp.exp(out), axis=1), 1.0, atol=1e-5))
    print("KERNEL_OK")
</pallas_src>

<mosaic_0001>
module attributes {stable_mosaic.version = 11 : i64} {
  func.func @_projection_kernel(%arg0: i32, %arg1: memref<16x8xf32, #tpu.memory_space<vmem>>, %arg2: memref<8x64xf32, #tpu.memory_space<vmem>>, %arg3: memref<64x8xf32, #tpu.memory_space<vmem>>, %arg4: memref<64x8xf32, #tpu.memory_space<vmem>>, %arg5: memref<16x64xbf16, #tpu.memory_space<vmem>>, %arg6: memref<8x16xf32, #tpu.memory_space<vmem>>, %arg7: memref<16x8xf32, #tpu.memory_space<vmem>>) attributes {dimension_semantics = [#tpu.dimension_semantics<parallel>], iteration_bounds = array<i64: 1>, scalar_prefetch = 0 : i64, scratch_operands = 0 : i64, tpu.core_type = #tpu.core_type<tc>, window_params = [{transform_indices = @transform_0, window_bounds = array<i64: 16, 8>}, {pipeline_mode = #tpu.pipeline_mode<synchronous>, transform_indices = @transform_1, window_bounds = array<i64: 8, 64>}, {pipeline_mode = #tpu.pipeline_mode<synchronous>, transform_indices = @transform_2, window_bounds = array<i64: 64, 8>}, {pipeline_mode = #tpu.pipeline_mode<synchronous>, transform_indices = @transform_3, window_bounds = array<i64: 64, 8>}, {transform_indices = @transform_4, window_bounds = array<i64: 16, 64>}, {transform_indices = @transform_5, window_bounds = array<i64: 8, 16>}, {transform_indices = @transform_6, window_bounds = array<i64: 16, 8>}]} {
    %c0 = arith.constant 0 : index
    %c0_0 = arith.constant 0 : index
    %0 = vector.load %arg1[%c0, %c0_0] : memref<16x8xf32, #tpu.memory_space<vmem>>, vector<16x8xf32>
    %c0_1 = arith.constant 0 : index
    %c0_2 = arith.constant 0 : index
    %1 = vector.load %arg2[%c0_1, %c0_2] : memref<8x64xf32, #tpu.memory_space<vmem>>, vector<8x64xf32>
    %cst = arith.constant dense<0.000000e+00> : vector<16x64xf32>
    %2 = tpu.matmul %0, %1, %cst {dimension_numbers = #tpu.dot_dimension_numbers<[1], [0], [0], [1], [0, 0, 1, 1], [], []>} : vector<16x8xf32>, vector<8x64xf32>, vector<16x64xf32> -> vector<16x64xf32>
    %c0_3 = arith.constant 0 : index
    %c0_4 = arith.constant 0 : index
    %3 = vector.load %arg4[%c0_3, %c0_4] : memref<64x8xf32, #tpu.memory_space<vmem>>, vector<64x8xf32>
    %cst_5 = arith.constant dense<0.000000e+00> : vector<16x8xf32>
    %4 = tpu.matmul %2, %3, %cst_5 {dimension_numbers = #tpu.dot_dimension_numbers<[1], [0], [0], [1], [0, 0, 1, 1], [], []>} : vector<16x64xf32>, vector<64x8xf32>, vector<16x8xf32> -> vector<16x8xf32>
    %c0_6 = arith.constant 0 : index
    %c0_7 = arith.constant 0 : index
    %5 = vector.load %arg7[%c0_6, %c0_7] : memref<16x8xf32, #tpu.memory_space<vmem>>, vector<16x8xf32>
    tpu.vector_store %arg7[%c0_6, %c0_7], %4 {strides = array<i32>} : memref<16x8xf32, #tpu.memory_space<vmem>>, vector<16x8xf32>,
    %c0_8 = arith.constant 0 : index
    %c0_9 = arith.constant 0 : index
    %6 = vector.load %arg3[%c0_8, %c0_9] : memref<64x8xf32, #tpu.memory_space<vmem>>, vector<64x8xf32>
    %cst_10 = arith.constant dense<0.000000e+00> : vector<8x16xf32>
    %7 = tpu.matmul %6, %2, %cst_10 {dimension_numbers = #tpu.dot_dimension_numbers<[0], [1], [1], [0], [0, 1, 1, 0], [], []>} : vector<64x8xf32>, vector<16x64xf32>, vector<8x16xf32> -> vector<8x16xf32>
    %c0_11 = arith.constant 0 : index
    %c0_12 = arith.constant 0 : index
    %8 = vector.load %arg6[%c0_11, %c0_12] : memref<8x16xf32, #tpu.memory_space<vmem>>, vector<8x16xf32>
    tpu.vector_store %arg6[%c0_11, %c0_12], %7 {strides = array<i32>} : memref<8x16xf32, #tpu.memory_space<vmem>>, vector<8x16xf32>,
    %9 = arith.truncf %2 : vector<16x64xf32> to vector<16x64xbf16>
    %c0_13 = arith.constant 0 : index
    %c0_14 = arith.constant 0 : index
    %10 = vector.load %arg5[%c0_13, %c0_14] : memref<16x64xbf16, #tpu.memory_space<vmem>>, vector<16x64xbf16>
    tpu.vector_store %arg5[%c0_13, %c0_14], %9 {strides = array<i32>} : memref<16x64xbf16, #tpu.memory_space<vmem>>, vector<16x64xbf16>,
    return
  }
  func.func @transform_0(%arg0: i32) -> (i32, i32) {
    %c0_i32 = arith.constant 0 : i32
    %c0_i32_0 = arith.constant 0 : i32
    return %arg0, %c0_i32 : i32, i32
  }
  func.func @transform_1(%arg0: i32) -> (i32, i32) {
    %c0_i32 = arith.constant 0 : i32
    %c0_i32_0 = arith.constant 0 : i32
    %c0_i32_1 = arith.constant 0 : i32
    return %c0_i32, %c0_i32_0 : i32, i32
  }
  func.func @transform_2(%arg0: i32) -> (i32, i32) {
    %c0_i32 = arith.constant 0 : i32
    %c0_i32_0 = arith.constant 0 : i32
    %c0_i32_1 = arith.constant 0 : i32
    return %c0_i32, %c0_i32_0 : i32, i32
  }
  func.func @transform_3(%arg0: i32) -> (i32, i32) {
    %c0_i32 = arith.constant 0 : i32
    %c0_i32_0 = arith.constant 0 : i32
    %c0_i32_1 = arith.constant 0 : i32
    return %c0_i32, %c0_i32_0 : i32, i32
  }
  func.func @transform_4(%arg0: i32) -> (i32, i32) {
    %c0_i32 = arith.constant 0 : i32
    %c0_i32_0 = arith.constant 0 : i32
    return %arg0, %c0_i32 : i32, i32
  }
  func.func @transform_5(%arg0: i32) -> (i32, i32) {
    %c0_i32 = arith.constant 0 : i32
    %c0_i32_0 = arith.constant 0 : i32
    return %c0_i32, %arg0 : i32, i32
  }
  func.func @transform_6(%arg0: i32) -> (i32, i32) {
    %c0_i32 = arith.constant 0 : i32
    %c0_i32_0 = arith.constant 0 : i32
    return %arg0, %c0_i32 : i32, i32
  }
}

</mosaic_0001>

<llo_original>
// kernel: tpu_custom_call.1
$region0: #{tpu_custom_call.1}
  #allocation0 [shape = 'u32[]', space=smem, size = 0x4, offset = 0x4, fixed_abs, tag = 'smem constant byte address 0x4 - core index']
  #allocation1 [shape = 'u32[144,128]{1,0:T(1,128)}', space=vmem, size = 0x12000, scoped, tag = 'internal scratch']
  %s0 = inlined_call_operand.vmem [shape: f32[16,8], index: 0, kind: input, shape index: {}]
  %s1 = inlined_call_operand.vmem [shape: f32[8,64], index: 1, kind: input, shape index: {}]
  %s2 = inlined_call_operand.vmem [shape: f32[64,8], index: 2, kind: input, shape index: {}]
  %s3 = inlined_call_operand.vmem [shape: f32[64,8], index: 3, kind: input, shape index: {}]
  %s4 = inlined_call_operand.hbm [shape: bf16[16,64], index: 4, kind: output, shape index: {0}]
  %s5 = inlined_call_operand.hbm [shape: f32[8,16], index: 5, kind: output, shape index: {1}]
  %s6 = inlined_call_operand.vmem [shape: f32[16,8], index: 6, kind: output, shape index: {2}]
  %7 = xla_tuple %s4, %s5, %s6
  %s8 = sld [smem:[#allocation0]]
  $region42: #{tpu_custom_call.1} parent=0
    _
  %s10 = ssub.s32 1, %s8
  %s11 = scalar_select 0, %s10, %s8
  $region1: #{tpu_custom_call.1} parent=0
    #allocation2 [shape = 'u8[4096]{0}', space=vmem, size = 0x1000, scoped, tag = 'output window, operand 0, single buffered']
    #allocation3 [shape = 's32[1]{0}', space=sflag, size = 0x4, scoped, tag = 'scoped memory for tpu_custom_call.1']
    #allocation4 [shape = 'u8[4096]{0}', space=vmem, size = 0x1000, scoped, tag = 'output window, operand 1, single buffered']
    #allocation5 [shape = 's32[1]{0}', space=sflag, size = 0x4, scoped, tag = 'scoped memory for tpu_custom_call.1']
    %12 = vsyncpa [#allocation3], 0
    %13 = vsyncpa [#allocation5], 0
    // Predicated region
    $region2: #{tpu_custom_call.1} parent=1 // pred_check
      _
    $region3: #{tpu_custom_call.1} parent=1 // pred_check_branch
      %15 = sbr.rel (0) target = $region5
    $region4: #{tpu_custom_call.1} parent=1 // pred_region
      _
    $region5: #{tpu_custom_call.1} parent=1 // pred_fallthru
      _
    // Predicated region
    $region6: #{tpu_custom_call.1} parent=1 // pred_check
      _
    $region7: #{tpu_custom_call.1} parent=1 // pred_check_branch
      %17 = sbr.rel (0) target = $region9
    $region8: #{tpu_custom_call.1} parent=1 // pred_region
      _
    $region9: #{tpu_custom_call.1} parent=1 // pred_fallthru
      _
    // Predicated region
    $region10: #{tpu_custom_call.1} parent=1 // pred_check
      _
    $region11: #{tpu_custom_call.1} parent=1 // pred_check_branch
      %19 = sbr.rel (0) target = $region13
    $region12: #{tpu_custom_call.1} parent=1 // pred_region
      _
    $region13: #{tpu_custom_call.1} parent=1 // pred_fallthru
      _
    // Predicated region
    $region14: #{tpu_custom_call.1} parent=1 // pred_check
      _
    $region15: #{tpu_custom_call.1} parent=1 // pred_check_branch
      %21 = sbr.rel (0) target = $region17
    $region16: #{tpu_custom_call.1} parent=1 // pred_region
      _
    $region17: #{tpu_custom_call.1} parent=1 // pred_fallthru
      _
    %v22 = vld [vmem:[%s0] sm:$0xff]
    %v23 = vld [vmem:[%s0 + $0x8] sm:$0xff]
    %v24 = vld [vmem:[%s1] sm:$0xff]
    %vm25 = vcmask 64512
    %v27 = vsel %vm25, %v22, 0
    %v30 = vsel %vm25, %v23, 0
    %32 = vmatprep.subr.mxu0 0.0
    %33 = vmatpush1.msra.mxu0 0.0
    %34 = vmatprep.subr.mxu0 0.0
    %35 = vmatpush1.msra.mxu0 0.0
    %36 = vmatprep.subr.mxu0 0.0
    %37 = vmatpush1.msra.mxu0 0.0
    %38 = vmatprep.subr.mxu0 0.0
    %39 = vmatpush1.msra.mxu0 0.0
    %40 = vmatprep.subr.mxu0 0.0
    %41 = vmatpush1.msra.mxu0 0.0
    %42 = vmatprep.subr.mxu0 0.0
    %43 = vmatpush1.msra.mxu0 0.0
    %44 = vmatprep.subr.mxu0 0.0
    %45 = vmatpush1.msra.mxu0 0.0
    %46 = vmatprep.subr.mxu0 0.0
    %47 = vmatpush1.msra.mxu0 0.0
    %48 = vmatprep.subr.mxu0 0.0
    %49 = vmatpush1.msra.mxu0 0.0
    %50 = vmatprep.subr.mxu0 0.0
    %51 = vmatpush1.msra.mxu0 0.0
    %52 = vmatprep.subr.mxu0 0.0
    %53 = vmatpush1.msra.mxu0 0.0
    %54 = vmatprep.subr.mxu0 0.0
    %55 = vmatpush1.msra.mxu0 0.0
    %56 = vmatprep.subr.mxu0 0.0
    %57 = vmatpush1.msra.mxu0 0.0
    %58 = vmatprep.subr.mxu0 0.0
    %59 = vmatpush1.msra.mxu0 0.0
    %60 = vmatprep.subr.mxu0 0.0
    %61 = vmatpush1.msra.mxu0 0.0
    %62 = vmatprep.subr.mxu0 0.0
    %63 = vmatpush1.msra.mxu0 %v24
    %64 = vmatprep.subr.mxu0 0.0
    %65 = vmatpush2.msra.mxu0 0.0
    %66 = vmatprep.subr.mxu0 0.0
    %67 = vmatpush2.msra.mxu0 0.0
    %68 = vmatprep.subr.mxu0 0.0
    %69 = vmatpush2.msra.mxu0 0.0
    %70 = vmatprep.subr.mxu0 0.0
    %71 = vmatpush2.msra.mxu0 0.0
    %72 = vmatprep.subr.mxu0 0.0
    %73 = vmatpush2.msra.mxu0 0.0
    %74 = vmatprep.subr.mxu0 0.0
    %75 = vmatpush2.msra.mxu0 0.0
    %76 = vmatprep.subr.mxu0 0.0
    %77 = vmatpush2.msra.mxu0 0.0
    %78 = vmatprep.subr.mxu0 0.0
    %79 = vmatpush2.msra.mxu0 0.0
    %80 = vmatprep.subr.mxu0 0.0
    %81 = vmatpush2.msra.mxu0 0.0
    %82 = vmatprep.subr.mxu0 0.0
    %83 = vmatpush2.msra.mxu0 0.0
    %84 = vmatprep.subr.mxu0 0.0
    %85 = vmatpush2.msra.mxu0 0.0
    %86 = vmatprep.subr.mxu0 0.0
    %87 = vmatpush2.msra.mxu0 0.0
    %88 = vmatprep.subr.mxu0 0.0
    %89 = vmatpush2.msra.mxu0 0.0
    %90 = vmatprep.subr.mxu0 0.0
    %91 = vmatpush2.msra.mxu0 0.0
    %92 = vmatprep.subr.mxu0 0.0
    %93 = vmatpush2.msra.mxu0 0.0
    %94 = vmatprep.subr.mxu0 0.0
    %95 = vmatpush2.msra.mxu0 0.0
    %96 = vmatprep.mubr.f32.mxu0 0.0
    %97 = vmatmul.mubr.f32.gmra.mxu0 %v27
    %v98 = vpop.f32.mrf.mxu0
    %v99 = vadd.f32 0.0, %v98
    %v100 = vpop.f32.mrf.mxu0
    %101 = vmatprep.mubr.f32.mxu0 0.0
    %102 = vmatmul.mubr.f32.gmra.mxu0 %v30
    %v103 = vpop.f32.mrf.mxu0
    %v104 = vadd.f32 0.0, %v103
    %v105 = vpop.f32.mrf.mxu0
    %106 = vdwg.mxu0
    %v107 = vld [vmem:[%s3] sm:$0xff]
    %v108 = vld [vmem:[%s3 + $0x8] sm:$0xff]
    %v109 = vld [vmem:[%s3 + $0x10] sm:$0xff]
    %v110 = vld [vmem:[%s3 + $0x18] sm:$0xff]
    %v111 = vld [vmem:[%s3 + $0x20] sm:$0xff]
    %v112 = vld [vmem:[%s3 + $0x28] sm:$0xff]
    %v113 = vld [vmem:[%s3 + $0x30] sm:$0xff]
    %v114 = vld [vmem:[%s3 + $0x38] sm:$0xff]
    %vm115 = vcmask 523264
    %v117 = vsel %vm115, %v99, 0
    %v120 = vsel %vm115, %v104, 0
    %122 = vmatprep.subr.mxu0 0.0
    %123 = vmatpush1.msra.mxu0 0.0
    %124 = vmatprep.subr.mxu0 0.0
    %125 = vmatpush1.msra.mxu0 0.0
    %126 = vmatprep.subr.mxu0 0.0
    %127 = vmatpush1.msra.mxu0 0.0
    %128 = vmatprep.subr.mxu0 0.0
    %129 = vmatpush1.msra.mxu0 0.0
    %130 = vmatprep.subr.mxu0 0.0
    %131 = vmatpush1.msra.mxu0 0.0
    %132 = vmatprep.subr.mxu0 0.0
    %133 = vmatpush1.msra.mxu0 0.0
    %134 = vmatprep.subr.mxu0 0.0
    %135 = vmatpush1.msra.mxu0 0.0
    %136 = vmatprep.subr.mxu0 0.0
    %137 = vmatpush1.msra.mxu0 0.0
    %138 = vmatprep.subr.mxu0 0.0
    %139 = vmatpush1.msra.mxu0 %v114
    %140 = vmatprep.subr.mxu0 0.0
    %141 = vmatpush1.msra.mxu0 %v113
    %142 = vmatprep.subr.mxu0 0.0
    %143 = vmatpush1.msra.mxu0 %v112
    %144 = vmatprep.subr.mxu0 0.0
    %145 = vmatpush1.msra.mxu0 %v111
    %146 = vmatprep.subr.mxu0 0.0
    %147 = vmatpush1.msra.mxu0 %v110
    %148 = vmatprep.subr.mxu0 0.0
    %149 = vmatpush1.msra.mxu0 %v109
    %150 = vmatprep.subr.mxu0 0.0
    %151 = vmatpush1.msra.mxu0 %v108
    %152 = vmatprep.subr.mxu0 0.0
    %153 = vmatpush1.msra.mxu0 %v107
    %154 = vmatprep.subr.mxu0 0.0
    %155 = vmatpush2.msra.mxu0 0.0
    %156 = vmatprep.subr.mxu0 0.0
    %157 = vmatpush2.msra.mxu0 0.0
    %158 = vmatprep.subr.mxu0 0.0
    %159 = vmatpush2.msra.mxu0 0.0
    %160 = vmatprep.subr.mxu0 0.0
    %161 = vmatpush2.msra.mxu0 0.0
    %162 = vmatprep.subr.mxu0 0.0
    %163 = vmatpush2.msra.mxu0 0.0
    %164 = vmatprep.subr.mxu0 0.0
    %165 = vmatpush2.msra.mxu0 0.0
    %166 = vmatprep.subr.mxu0 0.0
    %167 = vmatpush2.msra.mxu0 0.0
    %168 = vmatprep.subr.mxu0 0.0
    %169 = vmatpush2.msra.mxu0 0.0
    %170 = vmatprep.subr.mxu0 0.0
    %171 = vmatpush2.msra.mxu0 0.0
    %172 = vmatprep.subr.mxu0 0.0
    %173 = vmatpush2.msra.mxu0 0.0
    %174 = vmatprep.subr.mxu0 0.0
    %175 = vmatpush2.msra.mxu0 0.0
    %176 = vmatprep.subr.mxu0 0.0
    %177 = vmatpush2.msra.mxu0 0.0
    %178 = vmatprep.subr.mxu0 0.0
    %179 = vmatpush2.msra.mxu0 0.0
    %180 = vmatprep.subr.mxu0 0.0
    %181 = vmatpush2.msra.mxu0 0.0
    %182 = vmatprep.subr.mxu0 0.0
    %183 = vmatpush2.msra.mxu0 0.0
    %184 = vmatprep.subr.mxu0 0.0
    %185 = vmatpush2.msra.mxu0 0.0
    %186 = vmatprep.mubr.f32.mxu0 0.0
    %187 = vmatmul.mubr.f32.gmra.mxu0 %v117
    %v188 = vpop.f32.mrf.mxu0
    %v189 = vadd.f32 0.0, %v188
    %v190 = vpop.f32.mrf.mxu0
    %191 = vmatprep.mubr.f32.mxu0 0.0
    %192 = vmatmul.mubr.f32.gmra.mxu0 %v120
    %v193 = vpop.f32.mrf.mxu0
    %v194 = vadd.f32 0.0, %v193
    %v195 = vpop.f32.mrf.mxu0
    %196 = vdwg.mxu0
    %197 = vst.msk [vmem:[%s6] sm:$0xff] %vm25, %v189
    %198 = vst.msk [vmem:[%s6 + $0x8] sm:$0xff] %vm25, %v194
    %v199 = vld [vmem:[%s2] sm:$0xff]
    %v200 = vld [vmem:[%s2 + $0x8] sm:$0xff]
    %v201 = vld [vmem:[%s2 + $0x10] sm:$0xff]
    %v202 = vld [vmem:[%s2 + $0x18] sm:$0xff]
    %v203 = vld [vmem:[%s2 + $0x20] sm:$0xff]
    %v204 = vld [vmem:[%s2 + $0x28] sm:$0xff]
    %v205 = vld [vmem:[%s2 + $0x30] sm:$0xff]
    %v206 = vld [vmem:[%s2 + $0x38] sm:$0xff]
    %207 = vxpose.xlu0.b32.start [1/16] %v199, 128
    %208 = vxpose.xlu0.b32.cont [2/16] %v200, 128
    %209 = vxpose.xlu0.b32.cont [3/16] %v201, 128
    %210 = vxpose.xlu0.b32.cont [4/16] %v202, 128
    %211 = vxpose.xlu0.b32.cont [5/16] %v203, 128
    %212 = vxpose.xlu0.b32.cont [6/16] %v204, 128
    %213 = vxpose.xlu0.b32.cont [7/16] %v205, 128
    %214 = vxpose.xlu0.b32.cont [8/16] %v206, 128
    %215 = vxpose.xlu0.b32.cont [9/16] 0.0, 128
    %216 = vxpose.xlu0.b32.cont [10/16] 0.0, 128
    %217 = vxpose.xlu0.b32.cont [11/16] 0.0, 128
    %218 = vxpose.xlu0.b32.cont [12/16] 0.0, 128
    %219 = vxpose.xlu0.b32.cont [13/16] 0.0, 128
    %220 = vxpose.xlu0.b32.cont [14/16] 0.0, 128
    %221 = vxpose.xlu0.b32.cont [15/16] 0.0, 128
    %222 = vxpose.xlu0.b32.end [16/16] 0.0, 128
    %v223 = vpop.trf.xlu0
    %v224 = vpop.trf.xlu0
    %v225 = vpop.trf.xlu0
    %v226 = vpop.trf.xlu0
    %v227 = vpop.trf.xlu0
    %v228 = vpop.trf.xlu0
    %v229 = vpop.trf.xlu0
    %v230 = vpop.trf.xlu0
    %v231 = vpop.trf.xlu0
    %v232 = vpop.trf.xlu0
    %v233 = vpop.trf.xlu0
    %v234 = vpop.trf.xlu0
    %v235 = vpop.trf.xlu0
    %v236 = vpop.trf.xlu0
    %v237 = vpop.trf.xlu0
    %v238 = vpop.trf.xlu0
    %v240 = vsel %vm115, %v223, 0
    %242 = vmatprep.subr.mxu0 0.0
    %243 = vmatpush1.xpose.msra.mxu0 0.0
    %244 = vmatprep.subr.mxu0 0.0
    %245 = vmatpush1.xpose.msra.mxu0 0.0
    %246 = vmatprep.subr.mxu0 0.0
    %247 = vmatpush1.xpose.msra.mxu0 0.0
    %248 = vmatprep.subr.mxu0 0.0
    %249 = vmatpush1.xpose.msra.mxu0 0.0
    %250 = vmatprep.subr.mxu0 0.0
    %251 = vmatpush1.xpose.msra.mxu0 0.0
    %252 = vmatprep.subr.mxu0 0.0
    %253 = vmatpush1.xpose.msra.mxu0 0.0
    %254 = vmatprep.subr.mxu0 0.0
    %255 = vmatpush1.xpose.msra.mxu0 0.0
    %256 = vmatprep.subr.mxu0 0.0
    %257 = vmatpush1.xpose.msra.mxu0 0.0
    %258 = vmatprep.subr.mxu0 0.0
    %259 = vmatpush1.xpose.msra.mxu0 0.0
    %260 = vmatprep.subr.mxu0 0.0
    %261 = vmatpush1.xpose.msra.mxu0 0.0
    %262 = vmatprep.subr.mxu0 0.0
    %263 = vmatpush1.xpose.msra.mxu0 0.0
    %264 = vmatprep.subr.mxu0 0.0
    %265 = vmatpush1.xpose.msra.mxu0 0.0
    %266 = vmatprep.subr.mxu0 0.0
    %267 = vmatpush1.xpose.msra.mxu0 0.0
    %268 = vmatprep.subr.mxu0 0.0
    %269 = vmatpush1.xpose.msra.mxu0 0.0
    %270 = vmatprep.subr.mxu0 0.0
    %271 = vmatpush1.xpose.msra.mxu0 %v120
    %272 = vmatprep.subr.mxu0 0.0
    %273 = vmatpush1.xpose.msra.mxu0 %v117
    %274 = vmatprep.subr.mxu0 0.0
    %275 = vmatpush2.xpose.msra.mxu0 0.0
    %276 = vmatprep.subr.mxu0 0.0
    %277 = vmatpush2.xpose.msra.mxu0 0.0
    %278 = vmatprep.subr.mxu0 0.0
    %279 = vmatpush2.xpose.msra.mxu0 0.0
    %280 = vmatprep.subr.mxu0 0.0
    %281 = vmatpush2.xpose.msra.mxu0 0.0
    %282 = vmatprep.subr.mxu0 0.0
    %283 = vmatpush2.xpose.msra.mxu0 0.0
    %284 = vmatprep.subr.mxu0 0.0
    %285 = vmatpush2.xpose.msra.mxu0 0.0
    %286 = vmatprep.subr.mxu0 0.0
    %287 = vmatpush2.xpose.msra.mxu0 0.0
    %288 = vmatprep.subr.mxu0 0.0
    %289 = vmatpush2.xpose.msra.mxu0 0.0
    %290 = vmatprep.subr.mxu0 0.0
    %291 = vmatpush2.xpose.msra.mxu0 0.0
    %292 = vmatprep.subr.mxu0 0.0
    %293 = vmatpush2.xpose.msra.mxu0 0.0
    %294 = vmatprep.subr.mxu0 0.0
    %295 = vmatpush2.xpose.msra.mxu0 0.0
    %296 = vmatprep.subr.mxu0 0.0
    %297 = vmatpush2.xpose.msra.mxu0 0.0
    %298 = vmatprep.subr.mxu0 0.0
    %299 = vmatpush2.xpose.msra.mxu0 0.0
    %300 = vmatprep.subr.mxu0 0.0
    %301 = vmatpush2.xpose.msra.mxu0 0.0
    %302 = vmatprep.subr.mxu0 0.0
    %303 = vmatpush2.xpose.msra.mxu0 0.0
    %304 = vmatprep.subr.mxu0 0.0
    %305 = vmatpush2.xpose.msra.mxu0 0.0
    %306 = vmatprep.mubr.f32.mxu0 0.0
    %307 = vmatmul.mubr.f32.gmra.mxu0 %v240
    %v308 = vpop.f32.mrf.mxu0
    %v309 = vadd.f32 0.0, %v308
    %v310 = vpop.f32.mrf.mxu0
    %311 = vdwg.mxu0
    %vm312 = vcmask 130048
    %313 = vst.msk [vmem:[#allocation4] sm:$0xff] %vm312, %v309
    %v314 = vpack.c.bf16 %v104, %v99
    %v316 = vunpack.c.l.b16 %v314
    %v317 = vunpack.c.h.b16 %v314
    %v318 = vpack.c.b16 %v316, %v316
    %v319 = vpack.c.b16 %v317, %v317
    %vm322 = vcmask 519168
    %323 = vst.msk [vmem:[#allocation2] sm:$0xf] %vm322, %v318
    %324 = vst.msk [vmem:[#allocation2 + $0x4] sm:$0xf] %vm322, %v319
    // Predicated region
    $region18: #{tpu_custom_call.1} parent=1 // pred_check
      _
    $region19: #{tpu_custom_call.1} parent=1 // pred_check_branch
      %326 = sbr.rel (0) target = $region21
    $region20: #{tpu_custom_call.1} parent=1 // pred_region
      %s328 = ssub.s32 128, 128
      %329 = vsyncadd [#allocation3], %s328
      %s330 = sshll.u32 [#allocation2], 4
      %s331 = int_to_ptr.vmem [resolvable:$true] %s330
      %336 = dma.vmem_to_hbm [thread:$0]  %s331, 128, %s4, [#allocation3], 64, 64, 4
    $region21: #{tpu_custom_call.1} parent=1 // pred_fallthru
      _
    // Predicated region
    $region22: #{tpu_custom_call.1} parent=1 // pred_check
      _
    $region23: #{tpu_custom_call.1} parent=1 // pred_check_branch
      %338 = sbr.rel (0) target = $region25
    $region24: #{tpu_custom_call.1} parent=1 // pred_region
      %s340 = ssub.s32 128, 128
      %341 = vsyncadd [#allocation5], %s340
      %s343 = sshll.u32 [#allocation4], 4
      %s344 = int_to_ptr.vmem [resolvable:$true] %s343
      %346 = dma.vmem_to_hbm [thread:$0]  %s344, 128, %s5, [#allocation5]
    $region25: #{tpu_custom_call.1} parent=1 // pred_fallthru
      _
    // Predicated region
    $region26: #{tpu_custom_call.1} parent=1 // pred_check
      _
    $region27: #{tpu_custom_call.1} parent=1 // pred_check_branch
      %348 = sbr.rel (0) target = $region29
    $region28: #{tpu_custom_call.1} parent=1 // pred_region
      _
    $region29: #{tpu_custom_call.1} parent=1 // pred_fallthru
      _
    // Predicated region
    $region30: #{tpu_custom_call.1} parent=1 // pred_check
      _
    $region31: #{tpu_custom_call.1} parent=1 // pred_check_branch
      %350 = sbr.rel (0) target = $region33
    $region32: #{tpu_custom_call.1} parent=1 // pred_region
      %351 = dma.done [#allocation3], 128
    $region33: #{tpu_custom_call.1} parent=1 // pred_fallthru
      _
    // Predicated region
    $region34: #{tpu_custom_call.1} parent=1 // pred_check
      _
    $region35: #{tpu_custom_call.1} parent=1 // pred_check_branch
      %353 = sbr.rel (0) target = $region37
    $region36: #{tpu_custom_call.1} parent=1 // pred_region
      %354 = dma.done [#allocation5], 128
    $region37: #{tpu_custom_call.1} parent=1 // pred_fallthru
      _
    // Predicated region
    $region38: #{tpu_custom_call.1} parent=1 // pred_check
      _
    $region39: #{tpu_custom_call.1} parent=1 // pred_check_branch
      %356 = sbr.rel (0) target = $region41
    $region40: #{tpu_custom_call.1} parent=1 // pred_region
      _
    $region41: #{tpu_custom_call.1} parent=1 // pred_fallthru
      _
    %357 = vsyncpa [#allocation3], 1
    %358 = vsyncpa [#allocation5], 1

</llo_original>
